<compile_context>
chip_gen: v5e
topology: v5e:2x2
jax: 0.10.0
libtpu: 0.0.40
codegen_flags: <defaults>
</compile_context>

<pallas_src>
import jax
import jax.numpy as jnp
from jax.experimental import pallas as pl
from jax.experimental.pallas import tpu as pltpu


def _fpn_block_kernel(x_ref, skip_ref, w_ref, b_ref, out_ref):
    # x_ref:    (1, Th//2, W,  Cp)   coarse pyramid rows for this tile
    # skip_ref: (1, Th,    W2, Cs)   high-res skip rows for this tile
    # w_ref:    (Cs, Cp)             1x1 conv weight in matmul form
    # b_ref:    (1, Cp)              bias (f32)
    # out_ref:  (1, Th,    W2, Cp)
    x = x_ref[0]                      # (Th//2, W, Cp)
    skip = skip_ref[0]                # (Th,    W2, Cs)
    th_in, w_lo, cp = x.shape
    th_out, w_hi, cs = skip.shape

    # 1x1 conv == channel matmul on the lane axis (MXU path, f32 accumulate).
    conv = jnp.dot(skip.reshape(th_out * w_hi, cs), w_ref[...],
                   preferred_element_type=jnp.float32)
    conv = conv + b_ref[0].astype(jnp.float32)
    conv = conv.reshape(th_out, w_hi, cp)

    # Nearest 2x upsample: H doubling is a free leading-dim reshape; the
    # W-axis interleave is an XLU retile that hides under DMA slack in this
    # memory-bound kernel.
    x_f32 = x.astype(jnp.float32)
    x_up = jnp.broadcast_to(x_f32[:, None, :, None, :],
                            (th_in, 2, w_lo, 2, cp)).reshape(th_out, w_hi, cp)

    out_ref[0] = (x_up + conv).astype(out_ref.dtype)


def _choose_row_tile(H2, W, W2, Cp, Cs, in_isz, out_isz, budget_bytes=12 << 20):
    """Largest even row tile Th (dividing H2) whose double-buffered tiles fit budget."""
    per_row = (W2 * Cs * in_isz          # skip rows
               + W2 * Cp * out_isz       # out rows
               + (W * Cp * in_isz + 1) // 2)  # x rows (consumed at half rate)
    th = max(2, int(budget_bytes // (2 * per_row)))
    th = min(th, H2)
    if th % 2:
        th -= 1
    th = max(th, 2)
    while H2 % th:   # H2 is even, so th=2 always terminates this
        th -= 2
    return th


def fpn_block_forward_nhwc(x_nhwc, skip_nhwc, weight, bias, dropout=None):
    """Primary (transpose-free) FPNBlock forward in NHWC.

    x_nhwc:    (B, H,  W,  Cp)
    skip_nhwc: (B, 2H, 2W, Cs)
    weight:    (Cp, Cs, 1, 1) PyTorch Conv2d layout, or (Cs, Cp) matmul layout
    bias:      (Cp,)
    returns    (B, 2H, 2W, Cp) in x_nhwc.dtype
    """
    # TODO(synk): dropout path (F.dropout with training=True / switch_dropout)
    # not implemented; with dropout=None / eval mode it is an identity.
    del dropout

    B, H, W, Cp = x_nhwc.shape
    _, H2, W2, Cs = skip_nhwc.shape
    assert H2 == 2 * H and W2 == 2 * W

    if weight.ndim == 4:                               # (Cp, Cs, 1, 1)
        w = jnp.transpose(weight.reshape(Cp, Cs), (1, 0))   # -> (Cs, Cp)
    else:                                              # already (Cs, Cp)
        w = weight
    w = w.astype(x_nhwc.dtype)                         # MXU-native operand dtype
    b = bias.reshape(1, Cp).astype(jnp.float32)        # bias added in f32

    out_dtype = x_nhwc.dtype
    in_isz = jnp.dtype(skip_nhwc.dtype).itemsize
    x_isz = jnp.dtype(x_nhwc.dtype).itemsize
    out_isz = jnp.dtype(out_dtype).itemsize

    th = _choose_row_tile(H2, W, W2, Cp, Cs, in_isz, out_isz)

    # Explicit VMEM budget derived from the actual (double-buffered) tile sizes.
    skip_tile_b = th * W2 * Cs * in_isz
    x_tile_b = (th // 2) * W * Cp * x_isz
    out_tile_b = th * W2 * Cp * out_isz
    const_b = Cs * Cp * jnp.dtype(w.dtype).itemsize + Cp * 4
    vmem_need = 2 * (skip_tile_b + x_tile_b + out_tile_b + const_b)
    vmem_limit = int(min(48 << 20, max(2 * vmem_need, 16 << 20)))

    grid = (B, H2 // th)

    return pl.pallas_call(
        _fpn_block_kernel,
        out_shape=jax.ShapeDtypeStruct((B, H2, W2, Cp), out_dtype),
        grid_spec=pltpu.PrefetchScalarGridSpec(
            num_scalar_prefetch=0,
            grid=grid,
            in_specs=[
                pl.BlockSpec((1, th // 2, W, Cp), lambda bi, ti: (bi, ti, 0, 0)),
                pl.BlockSpec((1, th, W2, Cs), lambda bi, ti: (bi, ti, 0, 0)),
                pl.BlockSpec((Cs, Cp), lambda bi, ti: (0, 0)),
                pl.BlockSpec((1, Cp), lambda bi, ti: (0, 0)),
            ],
            out_specs=pl.BlockSpec((1, th, W2, Cp), lambda bi, ti: (bi, ti, 0, 0)),
        ),
        compiler_params=pltpu.CompilerParams(
            dimension_semantics=("parallel", "parallel"),
            vmem_limit_bytes=vmem_limit),
    )(x_nhwc, skip_nhwc, w, b)


def fpn_block_forward(x_nchw, skip_nchw, weight, bias, dropout=None):
    """NCHW compatibility wrapper matching the PyTorch module's convention.

    (For end-to-end performance, call fpn_block_forward_nhwc directly and keep
    the surrounding model NHWC; these transposes are only for layout compat.)
    """
    x = jnp.transpose(x_nchw, (0, 2, 3, 1))        # (B, H,  W,  Cp)
    skip = jnp.transpose(skip_nchw, (0, 2, 3, 1))  # (B, 2H, 2W, Cs)
    out_nhwc = fpn_block_forward_nhwc(x, skip, weight, bias, dropout)
    return jnp.transpose(out_nhwc, (0, 3, 1, 2))   # (B, Cp, 2H, 2W)


# ------------------------------ references ---------------------------------

def _reference_nchw(x_nchw, skip_nchw, weight, bias):
    Cp = weight.shape[0]
    x_up = jnp.repeat(jnp.repeat(x_nchw, 2, axis=2), 2, axis=3)
    w = weight.reshape(Cp, -1)                               # (Cp, Cs)
    conv = jnp.einsum('bchw,oc->bohw', skip_nchw, w,
                      precision=jax.lax.Precision.HIGHEST)
    conv = conv + bias[None, :, None, None]
    return x_up + conv


def _reference_nhwc(x_nhwc, skip_nhwc, w_cs_cp, bias):
    x_up = jnp.repeat(jnp.repeat(x_nhwc, 2, axis=1), 2, axis=2)
    conv = jnp.einsum('bhwc,co->bhwo', skip_nhwc, w_cs_cp,
                      precision=jax.lax.Precision.HIGHEST) + bias
    return x_up + conv


if __name__ == "__main__":
    # ---- Test 1: toy NCHW config (PyTorch-layout compatibility path) ----
    key = jax.random.PRNGKey(0)
    k1, k2, k3, k4 = jax.random.split(key, 4)

    B, Cp, Cs, H, W = 2, 8, 4, 8, 8
    x = jax.random.normal(k1, (B, Cp, H, W), jnp.float32)
    skip = jax.random.normal(k2, (B, Cs, 2 * H, 2 * W), jnp.float32)
    weight = jax.random.normal(k3, (Cp, Cs, 1, 1), jnp.float32) * 0.1
    bias = jax.random.normal(k4, (Cp,), jnp.float32) * 0.1

    out = jax.block_until_ready(fpn_block_forward(x, skip, weight, bias))
    ref = _reference_nchw(x, skip, weight, bias)
    assert out.shape == (B, Cp, 2 * H, 2 * W), out.shape
    assert jnp.allclose(out, ref, atol=1e-5, rtol=1e-5), \
        float(jnp.max(jnp.abs(out - ref)))

    # ---- Test 2: NHWC path (no layout transposes), lane-dense channels ----
    kx, ks, kw, kb = jax.random.split(jax.random.PRNGKey(1), 4)
    B2, Cp2, Cs2, H_, W_ = 2, 128, 128, 8, 8
    x2 = jax.random.normal(kx, (B2, H_, W_, Cp2), jnp.float32)
    s2 = jax.random.normal(ks, (B2, 2 * H_, 2 * W_, Cs2), jnp.float32)
    w2 = jax.random.normal(kw, (Cs2, Cp2), jnp.float32) * 0.05
    b2 = jax.random.normal(kb, (Cp2,), jnp.float32) * 0.1

    out2 = jax.block_until_ready(fpn_block_forward_nhwc(x2, s2, w2, b2))
    ref2 = _reference_nhwc(x2, s2, w2, b2)
    assert out2.shape == (B2, 2 * H_, 2 * W_, Cp2), out2.shape
    assert jnp.allclose(out2, ref2, atol=5e-3, rtol=5e-3), \
        float(jnp.max(jnp.abs(out2 - ref2)))

    # ---- Test 3: bf16 inputs/outputs (halved HBM traffic), f32 accumulate ----
    x3 = x2.astype(jnp.bfloat16)
    s3 = s2.astype(jnp.bfloat16)
    out3 = jax.block_until_ready(fpn_block_forward_nhwc(x3, s3, w2, b2))
    ref3 = _reference_nhwc(x3.astype(jnp.float32), s3.astype(jnp.float32),
                           w2.astype(jnp.bfloat16).astype(jnp.float32), b2)
    assert out3.dtype == jnp.bfloat16
    assert jnp.allclose(out3.astype(jnp.float32), ref3, atol=5e-2, rtol=5e-2), \
        float(jnp.max(jnp.abs(out3.astype(jnp.float32) - ref3)))

    print("KERNEL_OK")
</pallas_src>

<mosaic_0001>
module attributes {stable_mosaic.version = 11 : i64} {
  func.func @_fpn_block_kernel(%arg0: i32, %arg1: i32, %arg2: memref<1x8x8x8xf32, #tpu.memory_space<vmem>>, %arg3: memref<1x16x16x4xf32, #tpu.memory_space<vmem>>, %arg4: memref<4x8xf32, #tpu.memory_space<vmem>>, %arg5: memref<1x8xf32, #tpu.memory_space<vmem>>, %arg6: memref<1x16x16x8xf32, #tpu.memory_space<vmem>>) attributes {dimension_semantics = [#tpu.dimension_semantics<parallel>, #tpu.dimension_semantics<parallel>], iteration_bounds = array<i64: 2, 1>, scalar_prefetch = 0 : i64, scratch_operands = 0 : i64, tpu.core_type = #tpu.core_type<tc>, window_params = [{transform_indices = @transform_0, window_bounds = array<i64: 1, 8, 8, 8>}, {transform_indices = @transform_1, window_bounds = array<i64: 1, 16, 16, 4>}, {pipeline_mode = #tpu.pipeline_mode<synchronous>, transform_indices = @transform_2, window_bounds = array<i64: 4, 8>}, {pipeline_mode = #tpu.pipeline_mode<synchronous>, transform_indices = @transform_3, window_bounds = array<i64: 1, 8>}, {transform_indices = @transform_4, window_bounds = array<i64: 1, 16, 16, 8>}]} {
    %c0 = arith.constant 0 : index
    %c0_0 = arith.constant 0 : index
    %c0_1 = arith.constant 0 : index
    %c0_2 = arith.constant 0 : index
    %0 = vector.load %arg2[%c0, %c0_0, %c0_1, %c0_2] : memref<1x8x8x8xf32, #tpu.memory_space<vmem>>, vector<1x8x8x8xf32>
    %1 = vector.shape_cast %0 : vector<1x8x8x8xf32> to vector<8x8x8xf32>
    %c0_3 = arith.constant 0 : index
    %c0_4 = arith.constant 0 : index
    %c0_5 = arith.constant 0 : index
    %c0_6 = arith.constant 0 : index
    %2 = vector.load %arg3[%c0_3, %c0_4, %c0_5, %c0_6] : memref<1x16x16x4xf32, #tpu.memory_space<vmem>>, vector<1x16x16x4xf32>
    %3 = vector.shape_cast %2 : vector<1x16x16x4xf32> to vector<16x16x4xf32>
    %4 = vector.shape_cast %3 : vector<16x16x4xf32> to vector<256x4xf32>
    %c0_7 = arith.constant 0 : index
    %c0_8 = arith.constant 0 : index
    %5 = vector.load %arg4[%c0_7, %c0_8] : memref<4x8xf32, #tpu.memory_space<vmem>>, vector<4x8xf32>
    %cst = arith.constant dense<0.000000e+00> : vector<256x8xf32>
    %6 = tpu.matmul %4, %5, %cst {dimension_numbers = #tpu.dot_dimension_numbers<[1], [0], [0], [1], [0, 0, 1, 1], [], []>} : vector<256x4xf32>, vector<4x8xf32>, vector<256x8xf32> -> vector<256x8xf32>
    %c0_9 = arith.constant 0 : index
    %c0_10 = arith.constant 0 : index
    %7 = vector.load %arg5[%c0_9, %c0_10] : memref<1x8xf32, #tpu.memory_space<vmem>>, vector<1x8xf32>
    %8 = vector.shape_cast %7 : vector<1x8xf32> to vector<8xf32>
    %9 = vector.shape_cast %8 : vector<8xf32> to vector<1x8xf32>
    %10 = vector.broadcast %9 : vector<1x8xf32> to vector<256x8xf32>
    %11 = arith.addf %6, %10 : vector<256x8xf32>
    %12 = vector.shape_cast %11 : vector<256x8xf32> to vector<16x16x8xf32>
    %13 = vector.shape_cast %1 : vector<8x8x8xf32> to vector<8x1x8x1x8xf32>
    %14 = vector.shape_cast %13 : vector<8x1x8x1x8xf32> to vector<8x1x8x1x8xf32>
    %15 = vector.broadcast %14 : vector<8x1x8x1x8xf32> to vector<8x2x8x2x8xf32>
    %16 = vector.shape_cast %15 : vector<8x2x8x2x8xf32> to vector<16x16x8xf32>
    %17 = arith.addf %16, %12 : vector<16x16x8xf32>
    %c0_11 = arith.constant 0 : index
    %c0_12 = arith.constant 0 : index
    %c0_13 = arith.constant 0 : index
    %c0_14 = arith.constant 0 : index
    %18 = vector.load %arg6[%c0_11, %c0_12, %c0_13, %c0_14] : memref<1x16x16x8xf32, #tpu.memory_space<vmem>>, vector<1x16x16x8xf32>
    %19 = vector.shape_cast %18 : vector<1x16x16x8xf32> to vector<16x16x8xf32>
    %20 = vector.shape_cast %17 : vector<16x16x8xf32> to vector<1x16x16x8xf32>
    tpu.vector_store %arg6[%c0_11, %c0_12, %c0_13, %c0_14], %20 {strides = array<i32>} : memref<1x16x16x8xf32, #tpu.memory_space<vmem>>, vector<1x16x16x8xf32>,
    return
  }
  func.func @transform_0(%arg0: i32, %arg1: i32) -> (i32, i32, i32, i32) {
    %c0_i32 = arith.constant 0 : i32
    %c0_i32_0 = arith.constant 0 : i32
    %c0_i32_1 = arith.constant 0 : i32
    return %arg0, %arg1, %c0_i32, %c0_i32_0 : i32, i32, i32, i32
  }
  func.func @transform_1(%arg0: i32, %arg1: i32) -> (i32, i32, i32, i32) {
    %c0_i32 = arith.constant 0 : i32
    %c0_i32_0 = arith.constant 0 : i32
    %c0_i32_1 = arith.constant 0 : i32
    return %arg0, %arg1, %c0_i32, %c0_i32_0 : i32, i32, i32, i32
  }
  func.func @transform_2(%arg0: i32, %arg1: i32) -> (i32, i32) {
    %c0_i32 = arith.constant 0 : i32
    %c0_i32_0 = arith.constant 0 : i32
    %c0_i32_1 = arith.constant 0 : i32
    return %c0_i32, %c0_i32_0 : i32, i32
  }
  func.func @transform_3(%arg0: i32, %arg1: i32) -> (i32, i32) {
    %c0_i32 = arith.constant 0 : i32
    %c0_i32_0 = arith.constant 0 : i32
    %c0_i32_1 = arith.constant 0 : i32
    return %c0_i32, %c0_i32_0 : i32, i32
  }
  func.func @transform_4(%arg0: i32, %arg1: i32) -> (i32, i32, i32, i32) {
    %c0_i32 = arith.constant 0 : i32
    %c0_i32_0 = arith.constant 0 : i32
    %c0_i32_1 = arith.constant 0 : i32
    return %arg0, %arg1, %c0_i32, %c0_i32_0 : i32, i32, i32, i32
  }
}

</mosaic_0001>

<llo_original>
// kernel: tpu_custom_call.1
$region0: #{tpu_custom_call.1}
  #allocation0 [shape = 'u32[]', space=smem, size = 0x4, offset = 0x4, fixed_abs, tag = 'smem constant byte address 0x4 - core index']
  #allocation1 [shape = 'u32[72,128]{1,0:T(1,128)}', space=vmem, size = 0x9000, scoped, tag = 'internal scratch']
  %s0 = inlined_call_operand.vmem [shape: f32[2,8,8,8], index: 0, kind: input, shape index: {}]
  %s1 = inlined_call_operand.vmem [shape: f32[2,16,16,4], index: 1, kind: input, shape index: {}]
  %s2 = inlined_call_operand.vmem [shape: f32[4,8], index: 2, kind: input, shape index: {}]
  %s3 = inlined_call_operand.vmem [shape: f32[1,8], index: 3, kind: input, shape index: {}]
  %s4 = inlined_call_operand.vmem [shape: f32[2,16,16,8], index: 4, kind: output, shape index: {}]
  %s5 = sld [smem:[#allocation0]]
  $region49: #{tpu_custom_call.1} parent=0
    _
  %s7 = ssub.s32 1, %s5
  %s8 = scalar_select 0, %s7, %s5
  loop: start=0, step=1, limit=4
  $region2: #{tpu_custom_call.1} parent=0 // loop_pre_header
    _
  $region3: #{tpu_custom_call.1} parent=0 // loop_header
    %s10 = sphi 0, %s14
    %p11 = scmp.ge.s32.totalorder %s10, 4
    %s17 = sphi 0, %s29
    %s18 = sphi 0, %s25
    %s19 = sphi 0, %s17
    %s20 = sphi 0, %s18
    %s21 = sphi 0, %s19
    %s22 = sphi 0, %s20
    %s34 = sphi 0, %s36
    %s37 = sphi 0, %s34
    %s38 = sphi 0, %s37
    %s54 = sphi 0, %s38
    %s62 = sphi 0, %s64
    %s65 = sphi 0, %s62
    %s66 = sphi 0, %s65
    %s82 = sphi 0, %s66
    %s86 = sphi 0, %s86
    %s88 = sphi 0, %s86
    %s89 = sphi 0, %s88
    %s103 = sphi 0, %s89
    %s107 = sphi 0, %s107
    %s109 = sphi 0, %s107
    %s110 = sphi 0, %s109
    %s124 = sphi 0, %s110
    %s132 = sphi 0, %s134
    %s135 = sphi 0, %s132
    %s136 = sphi 0, %s135
    %s152 = sphi 0, %s136
  $region4: #{tpu_custom_call.1} parent=0 // loop_header_branch
    %13 = sbr.rel (%p11) target = $region8
  $region5: #{tpu_custom_call.1} parent=0 // loop_body
    %s15 = ssub.s32 %s10, 1
    %s16 = ssub.s32 %s10, 2
    %s23 = sadd.s32 1, %s18
    %p24 = scmp.ge.s32.totalorder %s23, 1
    %s25 = scalar_select %p24, 0, %s23
    %s26 = sadd.s32 1, %s17
    %s27 = scalar_select %p24, %s26, %s17
    %p28 = scmp.ge.s32.totalorder %s27, 2
    %s29 = scalar_select %p28, 0, %s27
    %s30 = ssub.s32 %s17, %s29
    %s31 = ssub.s32 %s18, %s25
    %s32 = sor.u32 %s30, %s31
    %p33 = scmp.eq.s32.totalorder %s32, 0
    %s35 = sadd.s32 %s34, 1
    %s36 = scalar_select %p33, %s34, %s35
    %p39 = pneg %p33
    %p40 = scmp.eq.s32.totalorder %s10, 1
    %p41 = por %p39, %p40
    %p42 = scmp.ne.s32.totalorder %s34, %s37
    %p43 = scmp.eq.s32.totalorder %s10, 0
    %p44 = por %p42, %p43
    %p45 = scmp.ne.s32.totalorder %s34, %s37
    %p46 = scmp.eq.s32.totalorder %s15, 1
    %p47 = por %p45, %p46
    %p48 = scmp.ne.s32.totalorder %s37, %s38
    %p49 = scmp.eq.s32.totalorder %s15, 0
    %p50 = por %p48, %p49
    %p51 = scmp.ne.s32.totalorder %s37, %s38
    %p52 = scmp.eq.s32.totalorder %s16, 1
    %p53 = por %p51, %p52
    %p55 = scmp.ne.s32.totalorder %s38, %s54
    %p56 = scmp.eq.s32.totalorder %s16, 0
    %p57 = por %p55, %p56
    %s58 = ssub.s32 %s17, %s29
    %s59 = ssub.s32 %s18, %s25
    %s60 = sor.u32 %s58, %s59
    %p61 = scmp.eq.s32.totalorder %s60, 0
    %s63 = sadd.s32 %s62, 1
    %s64 = scalar_select %p61, %s62, %s63
    %p67 = pneg %p61
    %p68 = scmp.eq.s32.totalorder %s10, 1
    %p69 = por %p67, %p68
    %p70 = scmp.ne.s32.totalorder %s62, %s65
    %p71 = scmp.eq.s32.totalorder %s10, 0
    %p72 = por %p70, %p71
    %p73 = scmp.ne.s32.totalorder %s62, %s65
    %p74 = scmp.eq.s32.totalorder %s15, 1
    %p75 = por %p73, %p74
    %p76 = scmp.ne.s32.totalorder %s65, %s66
    %p77 = scmp.eq.s32.totalorder %s15, 0
    %p78 = por %p76, %p77
    %p79 = scmp.ne.s32.totalorder %s65, %s66
    %p80 = scmp.eq.s32.totalorder %s16, 1
    %p81 = por %p79, %p80
    %p83 = scmp.ne.s32.totalorder %s66, %s82
    %p84 = scmp.eq.s32.totalorder %s16, 0
    %p85 = por %p83, %p84
    %s87 = sadd.s32 %s86, 1
    %p90 = scmp.eq.s32.totalorder %s10, 1
    %p91 = scmp.ne.s32.totalorder %s86, %s88
    %p92 = scmp.eq.s32.totalorder %s10, 0
    %p93 = por %p91, %p92
    %p94 = scmp.ne.s32.totalorder %s86, %s88
    %p95 = scmp.eq.s32.totalorder %s15, 1
    %p96 = por %p94, %p95
    %p97 = scmp.ne.s32.totalorder %s88, %s89
    %p98 = scmp.eq.s32.totalorder %s15, 0
    %p99 = por %p97, %p98
    %p100 = scmp.ne.s32.totalorder %s88, %s89
    %p101 = scmp.eq.s32.totalorder %s16, 1
    %p102 = por %p100, %p101
    %p104 = scmp.ne.s32.totalorder %s89, %s103
    %p105 = scmp.eq.s32.totalorder %s16, 0
    %p106 = por %p104, %p105
    %s108 = sadd.s32 %s107, 1
    %p111 = scmp.eq.s32.totalorder %s10, 1
    %p112 = scmp.ne.s32.totalorder %s107, %s109
    %p113 = scmp.eq.s32.totalorder %s10, 0
    %p114 = por %p112, %p113
    %p115 = scmp.ne.s32.totalorder %s107, %s109
    %p116 = scmp.eq.s32.totalorder %s15, 1
    %p117 = por %p115, %p116
    %p118 = scmp.ne.s32.totalorder %s109, %s110
    %p119 = scmp.eq.s32.totalorder %s15, 0
    %p120 = por %p118, %p119
    %p121 = scmp.ne.s32.totalorder %s109, %s110
    %p122 = scmp.eq.s32.totalorder %s16, 1
    %p123 = por %p121, %p122
    %p125 = scmp.ne.s32.totalorder %s110, %s124
    %p126 = scmp.eq.s32.totalorder %s16, 0
    %p127 = por %p125, %p126
    %s128 = ssub.s32 %s17, %s29
    %s129 = ssub.s32 %s18, %s25
    %s130 = sor.u32 %s128, %s129
    %p131 = scmp.eq.s32.totalorder %s130, 0
    %s133 = sadd.s32 %s132, 1
    %s134 = scalar_select %p131, %s132, %s133
    %p137 = pneg %p131
    %p138 = scmp.eq.s32.totalorder %s10, 1
    %p139 = por %p137, %p138
    %p140 = scmp.ne.s32.totalorder %s132, %s135
    %p141 = scmp.eq.s32.totalorder %s10, 0
    %p142 = por %p140, %p141
    %p143 = scmp.ne.s32.totalorder %s132, %s135
    %p144 = scmp.eq.s32.totalorder %s15, 1
    %p145 = por %p143, %p144
    %p146 = scmp.ne.s32.totalorder %s135, %s136
    %p147 = scmp.eq.s32.totalorder %s15, 0
    %p148 = por %p146, %p147
    %p149 = scmp.ne.s32.totalorder %s135, %s136
    %p150 = scmp.eq.s32.totalorder %s16, 1
    %p151 = por %p149, %p150
    %p153 = scmp.ne.s32.totalorder %s136, %s152
    %p154 = scmp.eq.s32.totalorder %s16, 0
    %p155 = por %p153, %p154
    %p156 = scmp.le.s32.totalorder 1, %s10
    %p157 = scmp.lt.s32.totalorder %s10, 3
    %p158 = pnand %p156, %p157
    %p159 = pneg %p158
    // Predicated region
    $region9: #{tpu_custom_call.1} parent=5 // pred_check
      _
    $region10: #{tpu_custom_call.1} parent=5 // pred_check_branch
      %161 = sbr.rel (%p158) target = $region12
    $region11: #{tpu_custom_call.1} parent=5 // pred_region
      %s162 = ssub.s32 %s10, 1
      // Predicated region
      $region13: #{tpu_custom_call.1} parent=11 // pred_check
        %p163 = pneg %p99
      $region14: #{tpu_custom_call.1} parent=11 // pred_check_branch
        %165 = sbr.rel (%p163) target = $region16
      $region15: #{tpu_custom_call.1} parent=11 // pred_region
        _
      $region16: #{tpu_custom_call.1} parent=11 // pred_fallthru
        _
      // Predicated region
      $region17: #{tpu_custom_call.1} parent=11 // pred_check
        %p166 = pneg %p120
      $region18: #{tpu_custom_call.1} parent=11 // pred_check_branch
        %168 = sbr.rel (%p166) target = $region20
      $region19: #{tpu_custom_call.1} parent=11 // pred_region
        _
      $region20: #{tpu_custom_call.1} parent=11 // pred_fallthru
        _
    $region12: #{tpu_custom_call.1} parent=5 // pred_fallthru
      _
    %p169 = scmp.lt.s32.totalorder %s10, 2
    // Predicated region
    $region21: #{tpu_custom_call.1} parent=5 // pred_check
      %p170 = pneg %p169
    $region22: #{tpu_custom_call.1} parent=5 // pred_check_branch
      %172 = sbr.rel (%p170) target = $region24
    $region23: #{tpu_custom_call.1} parent=5 // pred_region
      // Predicated region
      $region25: #{tpu_custom_call.1} parent=23 // pred_check
        %p173 = pneg %p44
      $region26: #{tpu_custom_call.1} parent=23 // pred_check_branch
        %175 = sbr.rel (%p173) target = $region28
      $region27: #{tpu_custom_call.1} parent=23 // pred_region
        %s176 = smul.u32 8, %s18
        %p177 = scmp.lt.s32.totalorder %s17, 1
        %s178 = scalar_select %p177, %s17, 1
        %p179 = scmp.lt.s32.totalorder %s176, 7
        %s180 = scalar_select %p179, %s176, 7
        %s181 = smul.addr %s178, 8
        %s182 = sadd.s32 %s180, %s181
        %s183 = smul.addr %s182, 8
        %s184 = scalar_lea.vmem %s0, %s183
        %s185 = smul.u32 8, %s18
      $region28: #{tpu_custom_call.1} parent=23 // pred_fallthru
        _
      // Predicated region
      $region29: #{tpu_custom_call.1} parent=23 // pred_check
        %p186 = pneg %p72
      $region30: #{tpu_custom_call.1} parent=23 // pred_check_branch
        %188 = sbr.rel (%p186) target = $region32
      $region31: #{tpu_custom_call.1} parent=23 // pred_region
        %s189 = smul.u32 16, %s18
        %p190 = scmp.lt.s32.totalorder %s17, 1
        %s191 = scalar_select %p190, %s17, 1
        %p192 = scmp.lt.s32.totalorder %s189, 15
        %s193 = scalar_select %p192, %s189, 15
        %s194 = smul.addr %s193, 2
        %s195 = smul.addr %s191, 32
        %s196 = sadd.s32 %s194, %s195
        %s197 = smul.addr %s196, 8
        %s198 = scalar_lea.vmem %s1, %s197
        %s199 = smul.u32 16, %s18
      $region32: #{tpu_custom_call.1} parent=23 // pred_fallthru
        _
    $region24: #{tpu_custom_call.1} parent=5 // pred_fallthru
      _
    %p200 = scmp.le.s32.totalorder 1, %s10
    %p201 = scmp.lt.s32.totalorder %s10, 3
    %p202 = pnand %p200, %p201
    %p203 = pneg %p202
    // Predicated region
    $region33: #{tpu_custom_call.1} parent=5 // pred_check
      _
    $region34: #{tpu_custom_call.1} parent=5 // pred_check_branch
      %205 = sbr.rel (%p202) target = $region36
    $region35: #{tpu_custom_call.1} parent=5 // pred_region
      %s206 = ssub.s32 %s10, 1
      %s207 = smul.u32 8, %s20
      %p208 = scmp.lt.s32.totalorder %s19, 1
      %s209 = scalar_select %p208, %s19, 1
      %p210 = scmp.lt.s32.totalorder %s207, 7
      %s211 = scalar_select %p210, %s207, 7
      %s212 = smul.addr %s209, 8
      %s213 = sadd.s32 %s211, %s212
      %s214 = smul.addr %s213, 8
      %s215 = scalar_lea.vmem %s0, %s214
      %p216 = pneg %p50
      %p217 = pneg %p47
      %s218 = smul.u32 16, %s20
      %p219 = scmp.lt.s32.totalorder %s19, 1
      %s220 = scalar_select %p219, %s19, 1
      %p221 = scmp.lt.s32.totalorder %s218, 15
      %s222 = scalar_select %p221, %s218, 15
      %s223 = smul.addr %s222, 2
      %s224 = smul.addr %s220, 32
      %s225 = sadd.s32 %s223, %s224
      %s226 = smul.addr %s225, 8
      %s227 = scalar_lea.vmem %s1, %s226
      %p228 = pneg %p78
      %p229 = pneg %p75
      %p230 = pneg %p99
      %p231 = pneg %p96
      %p232 = pneg %p120
      %p233 = pneg %p117
      %p234 = pneg %p148
      %p235 = pneg %p145
      %s236 = smul.u32 16, %s20
      %p237 = scmp.lt.s32.totalorder %s19, 1
      %s238 = scalar_select %p237, %s19, 1
      %p239 = scmp.lt.s32.totalorder %s236, 15
      %s240 = scalar_select %p239, %s236, 15
      %s241 = smul.addr %s240, 2
      %s242 = smul.addr %s238, 32
      %s243 = sadd.s32 %s241, %s242
      %s244 = smul.addr %s243, 8
      %s245 = scalar_lea.vmem %s4, %s244
      %s246 = smul.u32 8, %s20
      %p247 = scmp.lt.s32.totalorder %s19, 1
      %s248 = scalar_select %p247, %s19, 1
      %p249 = scmp.lt.s32.totalorder %s246, 7
      %s250 = scalar_select %p249, %s246, 7
      %s251 = smul.addr %s248, 8
      %s252 = sadd.s32 %s250, %s251
      %s253 = smul.addr %s252, 8
      %s254 = scalar_lea.vmem %s0, %s253
      %s255 = smul.u32 8, %s20
      %s256 = smul.u32 16, %s20
      %p257 = scmp.lt.s32.totalorder %s19, 1
      %s258 = scalar_select %p257, %s19, 1
      %p259 = scmp.lt.s32.totalorder %s256, 15
      %s260 = scalar_select %p259, %s256, 15
      %s261 = smul.addr %s260, 2
      %s262 = smul.addr %s258, 32
      %s263 = sadd.s32 %s261, %s262
      %s264 = smul.addr %s263, 8
      %s265 = scalar_lea.vmem %s1, %s264
      %s266 = smul.u32 16, %s20
      %s267 = smul.u32 16, %s20
      %p268 = scmp.lt.s32.totalorder %s19, 1
      %s269 = scalar_select %p268, %s19, 1
      %p270 = scmp.lt.s32.totalorder %s267, 15
      %s271 = scalar_select %p270, %s267, 15
      %s272 = smul.addr %s271, 2
      %s273 = smul.addr %s269, 32
      %s274 = sadd.s32 %s272, %s273
      %s275 = smul.addr %s274, 8
      %s276 = scalar_lea.vmem %s4, %s275
      %s277 = smul.u32 16, %s20
      %v278 = vld [vmem:[%s254] sm:$0xff]
      %v279 = vld [vmem:[%s254 + $0x8] sm:$0xff]
      %v280 = vld [vmem:[%s254 + $0x10] sm:$0xff]
      %v281 = vld [vmem:[%s254 + $0x18] sm:$0xff]
      %v282 = vld [vmem:[%s254 + $0x20] sm:$0xff]
      %v283 = vld [vmem:[%s254 + $0x28] sm:$0xff]
      %v284 = vld [vmem:[%s254 + $0x30] sm:$0xff]
      %v285 = vld [vmem:[%s254 + $0x38] sm:$0xff]
      %v286 = vld [vmem:[%s265] sm:$0xff]
      %v287 = vld [vmem:[%s265 + $0x8] sm:$0xff]
      %v288 = vld [vmem:[%s265 + $0x10] sm:$0xff]
      %v289 = vld [vmem:[%s265 + $0x18] sm:$0xff]
      %v290 = vld [vmem:[%s265 + $0x20] sm:$0xff]
      %v291 = vld [vmem:[%s265 + $0x28] sm:$0xff]
      %v292 = vld [vmem:[%s265 + $0x30] sm:$0xff]
      %v293 = vld [vmem:[%s265 + $0x38] sm:$0xff]
      %v294 = vld [vmem:[%s265 + $0x40] sm:$0xff]
      %v295 = vld [vmem:[%s265 + $0x48] sm:$0xff]
      %v296 = vld [vmem:[%s265 + $0x50] sm:$0xff]
      %v297 = vld [vmem:[%s265 + $0x58] sm:$0xff]
      %v298 = vld [vmem:[%s265 + $0x60] sm:$0xff]
      %v299 = vld [vmem:[%s265 + $0x68] sm:$0xff]
      %v300 = vld [vmem:[%s265 + $0x70] sm:$0xff]
      %v301 = vld [vmem:[%s265 + $0x78] sm:$0xff]
      %v302 = vld [vmem:[%s265 + $0x80] sm:$0xff]
      %v303 = vld [vmem:[%s265 + $0x88] sm:$0xff]
      %v304 = vld [vmem:[%s265 + $0x90] sm:$0xff]
      %v305 = vld [vmem:[%s265 + $0x98] sm:$0xff]
      %v306 = vld [vmem:[%s265 + $0xa0] sm:$0xff]
      %v307 = vld [vmem:[%s265 + $0xa8] sm:$0xff]
      %v308 = vld [vmem:[%s265 + $0xb0] sm:$0xff]
      %v309 = vld [vmem:[%s265 + $0xb8] sm:$0xff]
      %v310 = vld [vmem:[%s265 + $0xc0] sm:$0xff]
      %v311 = vld [vmem:[%s265 + $0xc8] sm:$0xff]
      %v312 = vld [vmem:[%s265 + $0xd0] sm:$0xff]
      %v313 = vld [vmem:[%s265 + $0xd8] sm:$0xff]
      %v314 = vld [vmem:[%s265 + $0xe0] sm:$0xff]
      %v315 = vld [vmem:[%s265 + $0xe8] sm:$0xff]
      %v316 = vld [vmem:[%s265 + $0xf0] sm:$0xff]
      %v317 = vld [vmem:[%s265 + $0xf8] sm:$0xff]
      %v318 = vld [vmem:[%s2] sm:$0xf]
      %v319 = vld [vmem:[%s3] sm:$0x1]
      %v321 = vperm.slane %v319, 0
      %vm323 = vcmask 31744
      %v325 = vsel %vm323, %v286, 0
      %v328 = vsel %vm323, %v287, 0
      %v331 = vsel %vm323, %v288, 0
      %v334 = vsel %vm323, %v289, 0
      %v337 = vsel %vm323, %v290, 0
      %v340 = vsel %vm323, %v291, 0
      %v343 = vsel %vm323, %v292, 0
      %v346 = vsel %vm323, %v293, 0
      %v349 = vsel %vm323, %v294, 0
      %v352 = vsel %vm323, %v295, 0
      %v355 = vsel %vm323, %v296, 0
      %v358 = vsel %vm323, %v297, 0
      %v361 = vsel %vm323, %v298, 0
      %v364 = vsel %vm323, %v299, 0
      %v367 = vsel %vm323, %v300, 0
      %v370 = vsel %vm323, %v301, 0
      %v373 = vsel %vm323, %v302, 0
      %v376 = vsel %vm323, %v303, 0
      %v379 = vsel %vm323, %v304, 0
      %v382 = vsel %vm323, %v305, 0
      %v385 = vsel %vm323, %v306, 0
      %v388 = vsel %vm323, %v307, 0
      %v391 = vsel %vm323, %v308, 0
      %v394 = vsel %vm323, %v309, 0
      %v397 = vsel %vm323, %v310, 0
      %v400 = vsel %vm323, %v311, 0
      %v403 = vsel %vm323, %v312, 0
      %v406 = vsel %vm323, %v313, 0
      %v409 = vsel %vm323, %v314, 0
      %v412 = vsel %vm323, %v315, 0
      %v415 = vsel %vm323, %v316, 0
      %v418 = vsel %vm323, %v317, 0
      %vm420 = vcmask 1043456
      %v422 = vsel %vm420, %v318, 0
      %424 = vmatpush.msra.mxu0 0.0
      %425 = vmatpush.msra.mxu0 0.0
      %426 = vmatpush.msra.mxu0 0.0
      %427 = vmatpush.msra.mxu0 0.0
      %428 = vmatpush.msra.mxu0 0.0
      %429 = vmatpush.msra.mxu0 0.0
      %430 = vmatpush.msra.mxu0 0.0
      %431 = vmatpush.msra.mxu0 0.0
      %432 = vmatpush.msra.mxu0 0.0
      %433 = vmatpush.msra.mxu0 0.0
      %434 = vmatpush.msra.mxu0 0.0
      %435 = vmatpush.msra.mxu0 0.0
      %436 = vmatpush.msra.mxu0 0.0
      %437 = vmatpush.msra.mxu0 0.0
      %438 = vmatpush.msra.mxu0 0.0
      %439 = vmatpush.msra.mxu0 %v422
      %440 = vmatmul.f32.gmra.mxu0 %v325
      %v441 = vpop.f32.mrf.mxu0
      %v442 = vadd.f32 %v321, %v441
      %443 = vmatmul.f32.gmra.mxu0 %v328
      %v444 = vpop.f32.mrf.mxu0
      %v445 = vadd.f32 %v321, %v444
      %446 = vmatmul.f32.gmra.mxu0 %v331
      %v447 = vpop.f32.mrf.mxu0
      %v448 = vadd.f32 %v321, %v447
      %449 = vmatmul.f32.gmra.mxu0 %v334
      %v450 = vpop.f32.mrf.mxu0
      %v451 = vadd.f32 %v321, %v450
      %452 = vmatmul.f32.gmra.mxu0 %v337
      %v453 = vpop.f32.mrf.mxu0
      %v454 = vadd.f32 %v321, %v453
      %455 = vmatmul.f32.gmra.mxu0 %v340
      %v456 = vpop.f32.mrf.mxu0
      %v457 = vadd.f32 %v321, %v456
      %458 = vmatmul.f32.gmra.mxu0 %v343
      %v459 = vpop.f32.mrf.mxu0
      %v460 = vadd.f32 %v321, %v459
      %461 = vmatmul.f32.gmra.mxu0 %v346
      %v462 = vpop.f32.mrf.mxu0
      %v463 = vadd.f32 %v321, %v462
      %464 = vmatmul.f32.gmra.mxu0 %v349
      %v465 = vpop.f32.mrf.mxu0
      %v466 = vadd.f32 %v321, %v465
      %467 = vmatmul.f32.gmra.mxu0 %v352
      %v468 = vpop.f32.mrf.mxu0
      %v469 = vadd.f32 %v321, %v468
      %470 = vmatmul.f32.gmra.mxu0 %v355
      %v471 = vpop.f32.mrf.mxu0
      %v472 = vadd.f32 %v321, %v471
      %473 = vmatmul.f32.gmra.mxu0 %v358
      %v474 = vpop.f32.mrf.mxu0
      %v475 = vadd.f32 %v321, %v474
      %476 = vmatmul.f32.gmra.mxu0 %v361
      %v477 = vpop.f32.mrf.mxu0
      %v478 = vadd.f32 %v321, %v477
      %479 = vmatmul.f32.gmra.mxu0 %v364
      %v480 = vpop.f32.mrf.mxu0
      %v481 = vadd.f32 %v321, %v480
      %482 = vmatmul.f32.gmra.mxu0 %v367
      %v483 = vpop.f32.mrf.mxu0
      %v484 = vadd.f32 %v321, %v483
      %485 = vmatmul.f32.gmra.mxu0 %v370
      %v486 = vpop.f32.mrf.mxu0
      %v487 = vadd.f32 %v321, %v486
      %488 = vmatmul.f32.gmra.mxu0 %v373
      %v489 = vpop.f32.mrf.mxu0
      %v490 = vadd.f32 %v321, %v489
      %491 = vmatmul.f32.gmra.mxu0 %v376
      %v492 = vpop.f32.mrf.mxu0
      %v493 = vadd.f32 %v321, %v492
      %494 = vmatmul.f32.gmra.mxu0 %v379
      %v495 = vpop.f32.mrf.mxu0
      %v496 = vadd.f32 %v321, %v495
      %497 = vmatmul.f32.gmra.mxu0 %v382
      %v498 = vpop.f32.mrf.mxu0
      %v499 = vadd.f32 %v321, %v498
      %500 = vmatmul.f32.gmra.mxu0 %v385
      %v501 = vpop.f32.mrf.mxu0
      %v502 = vadd.f32 %v321, %v501
      %503 = vmatmul.f32.gmra.mxu0 %v388
      %v504 = vpop.f32.mrf.mxu0
      %v505 = vadd.f32 %v321, %v504
      %506 = vmatmul.f32.gmra.mxu0 %v391
      %v507 = vpop.f32.mrf.mxu0
      %v508 = vadd.f32 %v321, %v507
      %509 = vmatmul.f32.gmra.mxu0 %v394
      %v510 = vpop.f32.mrf.mxu0
      %v511 = vadd.f32 %v321, %v510
      %512 = vmatmul.f32.gmra.mxu0 %v397
      %v513 = vpop.f32.mrf.mxu0
      %v514 = vadd.f32 %v321, %v513
      %515 = vmatmul.f32.gmra.mxu0 %v400
      %v516 = vpop.f32.mrf.mxu0
      %v517 = vadd.f32 %v321, %v516
      %518 = vmatmul.f32.gmra.mxu0 %v403
      %v519 = vpop.f32.mrf.mxu0
      %v520 = vadd.f32 %v321, %v519
      %521 = vmatmul.f32.gmra.mxu0 %v406
      %v522 = vpop.f32.mrf.mxu0
      %v523 = vadd.f32 %v321, %v522
      %524 = vmatmul.f32.gmra.mxu0 %v409
      %v525 = vpop.f32.mrf.mxu0
      %v526 = vadd.f32 %v321, %v525
      %527 = vmatmul.f32.gmra.mxu0 %v412
      %v528 = vpop.f32.mrf.mxu0
      %v529 = vadd.f32 %v321, %v528
      %530 = vmatmul.f32.gmra.mxu0 %v415
      %v531 = vpop.f32.mrf.mxu0
      %v532 = vadd.f32 %v321, %v531
      %533 = vmatmul.f32.gmra.mxu0 %v418
      %v534 = vpop.f32.mrf.mxu0
      %v535 = vadd.f32 %v321, %v534
      %536 = vdwg.mxu0
      %v545 = vrot.slane %v278, 1
      %v546 = vrot.slane %v278, 2
      %v547 = vrot.slane %v278, 3
      %v548 = vrot.slane %v278, 4
      %v549 = vrot.slane %v278, 5
      %v550 = vrot.slane %v278, 6
      %v551 = vrot.slane %v278, 7
      %v552 = vrot.slane %v279, 1
      %v553 = vrot.slane %v279, 2
      %v554 = vrot.slane %v279, 3
      %v555 = vrot.slane %v279, 4
      %v556 = vrot.slane %v279, 5
      %v557 = vrot.slane %v279, 6
      %v558 = vrot.slane %v279, 7
      %v559 = vrot.slane %v280, 1
      %v560 = vrot.slane %v280, 2
      %v561 = vrot.slane %v280, 3
      %v562 = vrot.slane %v280, 4
      %v563 = vrot.slane %v280, 5
      %v564 = vrot.slane %v280, 6
      %v565 = vrot.slane %v280, 7
      %v566 = vrot.slane %v281, 1
      %v567 = vrot.slane %v281, 2
      %v568 = vrot.slane %v281, 3
      %v569 = vrot.slane %v281, 4
      %v570 = vrot.slane %v281, 5
      %v571 = vrot.slane %v281, 6
      %v572 = vrot.slane %v281, 7
      %v573 = vrot.slane %v282, 1
      %v574 = vrot.slane %v282, 2
      %v575 = vrot.slane %v282, 3
      %v576 = vrot.slane %v282, 4
      %v577 = vrot.slane %v282, 5
      %v578 = vrot.slane %v282, 6
      %v579 = vrot.slane %v282, 7
      %v580 = vrot.slane %v283, 1
      %v581 = vrot.slane %v283, 2
      %v582 = vrot.slane %v283, 3
      %v583 = vrot.slane %v283, 4
      %v584 = vrot.slane %v283, 5
      %v585 = vrot.slane %v283, 6
      %v586 = vrot.slane %v283, 7
      %v587 = vrot.slane %v284, 1
      %v588 = vrot.slane %v284, 2
      %v589 = vrot.slane %v284, 3
      %v590 = vrot.slane %v284, 4
      %v591 = vrot.slane %v284, 5
      %v592 = vrot.slane %v284, 6
      %v593 = vrot.slane %v284, 7
      %v594 = vrot.slane %v285, 1
      %v595 = vrot.slane %v285, 2
      %v596 = vrot.slane %v285, 3
      %v597 = vrot.slane %v285, 4
      %v598 = vrot.slane %v285, 5
      %v599 = vrot.slane %v285, 6
      %v600 = vrot.slane %v285, 7
      %v601 = vperm.slane %v278, 0
      %v602 = vperm.slane %v545, 0
      %v603 = vperm.slane %v546, 0
      %v604 = vperm.slane %v547, 0
      %v605 = vperm.slane %v548, 0
      %v606 = vperm.slane %v549, 0
      %v607 = vperm.slane %v550, 0
      %v608 = vperm.slane %v551, 0
      %v609 = vperm.slane %v279, 0
      %v610 = vperm.slane %v552, 0
      %v611 = vperm.slane %v553, 0
      %v612 = vperm.slane %v554, 0
      %v613 = vperm.slane %v555, 0
      %v614 = vperm.slane %v556, 0
      %v615 = vperm.slane %v557, 0
      %v616 = vperm.slane %v558, 0
      %v617 = vperm.slane %v280, 0
      %v618 = vperm.slane %v559, 0
      %v619 = vperm.slane %v560, 0
      %v620 = vperm.slane %v561, 0
      %v621 = vperm.slane %v562, 0
      %v622 = vperm.slane %v563, 0
      %v623 = vperm.slane %v564, 0
      %v624 = vperm.slane %v565, 0
      %v625 = vperm.slane %v281, 0
      %v626 = vperm.slane %v566, 0
      %v627 = vperm.slane %v567, 0
      %v628 = vperm.slane %v568, 0
      %v629 = vperm.slane %v569, 0
      %v630 = vperm.slane %v570, 0
      %v631 = vperm.slane %v571, 0
      %v632 = vperm.slane %v572, 0
      %v633 = vperm.slane %v282, 0
      %v634 = vperm.slane %v573, 0
      %v635 = vperm.slane %v574, 0
      %v636 = vperm.slane %v575, 0
      %v637 = vperm.slane %v576, 0
      %v638 = vperm.slane %v577, 0
      %v639 = vperm.slane %v578, 0
      %v640 = vperm.slane %v579, 0
      %v641 = vperm.slane %v283, 0
      %v642 = vperm.slane %v580, 0
      %v643 = vperm.slane %v581, 0
      %v644 = vperm.slane %v582, 0
      %v645 = vperm.slane %v583, 0
      %v646 = vperm.slane %v584, 0
      %v647 = vperm.slane %v585, 0
      %v648 = vperm.slane %v586, 0
      %v649 = vperm.slane %v284, 0
      %v650 = vperm.slane %v587, 0
      %v651 = vperm.slane %v588, 0
      %v652 = vperm.slane %v589, 0
      %v653 = vperm.slane %v590, 0
      %v654 = vperm.slane %v591, 0
      %v655 = vperm.slane %v592, 0
      %v656 = vperm.slane %v593, 0
      %v657 = vperm.slane %v285, 0
      %v658 = vperm.slane %v594, 0
      %v659 = vperm.slane %v595, 0
      %v660 = vperm.slane %v596, 0
      %v661 = vperm.slane %v597, 0
      %v662 = vperm.slane %v598, 0
      %v663 = vperm.slane %v599, 0
      %v664 = vperm.slane %v600, 0
      %v761 = vrot.slane %v442, 2
      %v762 = vrot.slane %v442, 4
      %v763 = vrot.slane %v442, 6
      %v764 = vrot.slane %v445, 2
      %v765 = vrot.slane %v445, 4
      %v766 = vrot.slane %v445, 6
      %v767 = vrot.slane %v448, 2
      %v768 = vrot.slane %v448, 4
      %v769 = vrot.slane %v448, 6
      %v770 = vrot.slane %v451, 2
      %v771 = vrot.slane %v451, 4
      %v772 = vrot.slane %v451, 6
      %v773 = vrot.slane %v454, 2
      %v774 = vrot.slane %v454, 4
      %v775 = vrot.slane %v454, 6
      %v776 = vrot.slane %v457, 2
      %v777 = vrot.slane %v457, 4
      %v778 = vrot.slane %v457, 6
      %v779 = vrot.slane %v460, 2
      %v780 = vrot.slane %v460, 4
      %v781 = vrot.slane %v460, 6
      %v782 = vrot.slane %v463, 2
      %v783 = vrot.slane %v463, 4
      %v784 = vrot.slane %v463, 6
      %v785 = vrot.slane %v466, 2
      %v786 = vrot.slane %v466, 4
      %v787 = vrot.slane %v466, 6
      %v788 = vrot.slane %v469, 2
      %v789 = vrot.slane %v469, 4
      %v790 = vrot.slane %v469, 6
      %v791 = vrot.slane %v472, 2
      %v792 = vrot.slane %v472, 4
      %v793 = vrot.slane %v472, 6
      %v794 = vrot.slane %v475, 2
      %v795 = vrot.slane %v475, 4
      %v796 = vrot.slane %v475, 6
      %v797 = vrot.slane %v478, 2
      %v798 = vrot.slane %v478, 4
      %v799 = vrot.slane %v478, 6
      %v800 = vrot.slane %v481, 2
      %v801 = vrot.slane %v481, 4
      %v802 = vrot.slane %v481, 6
      %v803 = vrot.slane %v484, 2
      %v804 = vrot.slane %v484, 4
      %v805 = vrot.slane %v484, 6
      %v806 = vrot.slane %v487, 2
      %v807 = vrot.slane %v487, 4
      %v808 = vrot.slane %v487, 6
      %v809 = vrot.slane %v490, 2
      %v810 = vrot.slane %v490, 4
      %v811 = vrot.slane %v490, 6
      %v812 = vrot.slane %v493, 2
      %v813 = vrot.slane %v493, 4
      %v814 = vrot.slane %v493, 6
      %v815 = vrot.slane %v496, 2
      %v816 = vrot.slane %v496, 4
      %v817 = vrot.slane %v496, 6
      %v818 = vrot.slane %v499, 2
      %v819 = vrot.slane %v499, 4
      %v820 = vrot.slane %v499, 6
      %v821 = vrot.slane %v502, 2
      %v822 = vrot.slane %v502, 4
      %v823 = vrot.slane %v502, 6
      %v824 = vrot.slane %v505, 2
      %v825 = vrot.slane %v505, 4
      %v826 = vrot.slane %v505, 6
      %v827 = vrot.slane %v508, 2
      %v828 = vrot.slane %v508, 4
      %v829 = vrot.slane %v508, 6
      %v830 = vrot.slane %v511, 2
      %v831 = vrot.slane %v511, 4
      %v832 = vrot.slane %v511, 6
      %v833 = vrot.slane %v514, 2
      %v834 = vrot.slane %v514, 4
      %v835 = vrot.slane %v514, 6
      %v836 = vrot.slane %v517, 2
      %v837 = vrot.slane %v517, 4
      %v838 = vrot.slane %v517, 6
      %v839 = vrot.slane %v520, 2
      %v840 = vrot.slane %v520, 4
      %v841 = vrot.slane %v520, 6
      %v842 = vrot.slane %v523, 2
      %v843 = vrot.slane %v523, 4
      %v844 = vrot.slane %v523, 6
      %v845 = vrot.slane %v526, 2
      %v846 = vrot.slane %v526, 4
      %v847 = vrot.slane %v526, 6
      %v848 = vrot.slane %v529, 2
      %v849 = vrot.slane %v529, 4
      %v850 = vrot.slane %v529, 6
      %v851 = vrot.slane %v532, 2
      %v852 = vrot.slane %v532, 4
      %v853 = vrot.slane %v532, 6
      %v854 = vrot.slane %v535, 2
      %v855 = vrot.slane %v535, 4
      %v856 = vrot.slane %v535, 6
      %v953 = vadd.f32 %v601, %v442
      %v954 = vadd.f32 %v602, %v761
      %v955 = vadd.f32 %v603, %v762
      %v956 = vadd.f32 %v604, %v763
      %v957 = vadd.f32 %v605, %v445
      %v958 = vadd.f32 %v606, %v764
      %v959 = vadd.f32 %v607, %v765
      %v960 = vadd.f32 %v608, %v766
      %v961 = vadd.f32 %v601, %v448
      %v962 = vadd.f32 %v602, %v767
      %v963 = vadd.f32 %v603, %v768
      %v964 = vadd.f32 %v604, %v769
      %v965 = vadd.f32 %v605, %v451
      %v966 = vadd.f32 %v606, %v770
      %v967 = vadd.f32 %v607, %v771
      %v968 = vadd.f32 %v608, %v772
      %v969 = vadd.f32 %v609, %v454
      %v970 = vadd.f32 %v610, %v773
      %v971 = vadd.f32 %v611, %v774
      %v972 = vadd.f32 %v612, %v775
      %v973 = vadd.f32 %v613, %v457
      %v974 = vadd.f32 %v614, %v776
      %v975 = vadd.f32 %v615, %v777
      %v976 = vadd.f32 %v616, %v778
      %v977 = vadd.f32 %v609, %v460
      %v978 = vadd.f32 %v610, %v779
      %v979 = vadd.f32 %v611, %v780
      %v980 = vadd.f32 %v612, %v781
      %v981 = vadd.f32 %v613, %v463
      %v982 = vadd.f32 %v614, %v782
      %v983 = vadd.f32 %v615, %v783
      %v984 = vadd.f32 %v616, %v784
      %v985 = vadd.f32 %v617, %v466
      %v986 = vadd.f32 %v618, %v785
      %v987 = vadd.f32 %v619, %v786
      %v988 = vadd.f32 %v620, %v787
      %v989 = vadd.f32 %v621, %v469
      %v990 = vadd.f32 %v622, %v788
      %v991 = vadd.f32 %v623, %v789
      %v992 = vadd.f32 %v624, %v790
      %v993 = vadd.f32 %v617, %v472
      %v994 = vadd.f32 %v618, %v791
      %v995 = vadd.f32 %v619, %v792
      %v996 = vadd.f32 %v620, %v793
      %v997 = vadd.f32 %v621, %v475
      %v998 = vadd.f32 %v622, %v794
      %v999 = vadd.f32 %v623, %v795
      %v1000 = vadd.f32 %v624, %v796
      %v1001 = vadd.f32 %v625, %v478
      %v1002 = vadd.f32 %v626, %v797
      %v1003 = vadd.f32 %v627, %v798
      %v1004 = vadd.f32 %v628, %v799
      %v1005 = vadd.f32 %v629, %v481
      %v1006 = vadd.f32 %v630, %v800
      %v1007 = vadd.f32 %v631, %v801
      %v1008 = vadd.f32 %v632, %v802
      %v1009 = vadd.f32 %v625, %v484
      %v1010 = vadd.f32 %v626, %v803
      %v1011 = vadd.f32 %v627, %v804
      %v1012 = vadd.f32 %v628, %v805
      %v1013 = vadd.f32 %v629, %v487
      %v1014 = vadd.f32 %v630, %v806
      %v1015 = vadd.f32 %v631, %v807
      %v1016 = vadd.f32 %v632, %v808
      %v1017 = vadd.f32 %v633, %v490
      %v1018 = vadd.f32 %v634, %v809
      %v1019 = vadd.f32 %v635, %v810
      %v1020 = vadd.f32 %v636, %v811
      %v1021 = vadd.f32 %v637, %v493
      %v1022 = vadd.f32 %v638, %v812
      %v1023 = vadd.f32 %v639, %v813
      %v1024 = vadd.f32 %v640, %v814
      %v1025 = vadd.f32 %v633, %v496
      %v1026 = vadd.f32 %v634, %v815
      %v1027 = vadd.f32 %v635, %v816
      %v1028 = vadd.f32 %v636, %v817
      %v1029 = vadd.f32 %v637, %v499
      %v1030 = vadd.f32 %v638, %v818
      %v1031 = vadd.f32 %v639, %v819
      %v1032 = vadd.f32 %v640, %v820
      %v1033 = vadd.f32 %v641, %v502
      %v1034 = vadd.f32 %v642, %v821
      %v1035 = vadd.f32 %v643, %v822
      %v1036 = vadd.f32 %v644, %v823
      %v1037 = vadd.f32 %v645, %v505
      %v1038 = vadd.f32 %v646, %v824
      %v1039 = vadd.f32 %v647, %v825
      %v1040 = vadd.f32 %v648, %v826
      %v1041 = vadd.f32 %v641, %v508
      %v1042 = vadd.f32 %v642, %v827
      %v1043 = vadd.f32 %v643, %v828
      %v1044 = vadd.f32 %v644, %v829
      %v1045 = vadd.f32 %v645, %v511
      %v1046 = vadd.f32 %v646, %v830
      %v1047 = vadd.f32 %v647, %v831
      %v1048 = vadd.f32 %v648, %v832
      %v1049 = vadd.f32 %v649, %v514
      %v1050 = vadd.f32 %v650, %v833
      %v1051 = vadd.f32 %v651, %v834
      %v1052 = vadd.f32 %v652, %v835
      %v1053 = vadd.f32 %v653, %v517
      %v1054 = vadd.f32 %v654, %v836
      %v1055 = vadd.f32 %v655, %v837
      %v1056 = vadd.f32 %v656, %v838
      %v1057 = vadd.f32 %v649, %v520
      %v1058 = vadd.f32 %v650, %v839
      %v1059 = vadd.f32 %v651, %v840
      %v1060 = vadd.f32 %v652, %v841
      %v1061 = vadd.f32 %v653, %v523
      %v1062 = vadd.f32 %v654, %v842
      %v1063 = vadd.f32 %v655, %v843
      %v1064 = vadd.f32 %v656, %v844
      %v1065 = vadd.f32 %v657, %v526
      %v1066 = vadd.f32 %v658, %v845
      %v1067 = vadd.f32 %v659, %v846
      %v1068 = vadd.f32 %v660, %v847
      %v1069 = vadd.f32 %v661, %v529
      %v1070 = vadd.f32 %v662, %v848
      %v1071 = vadd.f32 %v663, %v849
      %v1072 = vadd.f32 %v664, %v850
      %v1073 = vadd.f32 %v657, %v532
      %v1074 = vadd.f32 %v658, %v851
      %v1075 = vadd.f32 %v659, %v852
      %v1076 = vadd.f32 %v660, %v853
      %v1077 = vadd.f32 %v661, %v535
      %v1078 = vadd.f32 %v662, %v854
      %v1079 = vadd.f32 %v663, %v855
      %v1080 = vadd.f32 %v664, %v856
      %1209 = vst [vmem:[#allocation1] ss:$4 sm:$0xff] %v953
      %s1210 = scalar_lea.vmem [#allocation1], 1
      %1211 = vst [vmem:[%s1210] ss:$4 sm:$0xff] %v954
      %s1212 = scalar_lea.vmem [#allocation1], 2
      %1213 = vst [vmem:[%s1212] ss:$4 sm:$0xff] %v955
      %s1214 = scalar_lea.vmem [#allocation1], 3
      %1215 = vst [vmem:[%s1214] ss:$4 sm:$0xff] %v956
      %s1216 = scalar_lea.vmem [#allocation1], 32
      %1217 = vst [vmem:[%s1216] ss:$4 sm:$0xff] %v957
      %s1218 = scalar_lea.vmem [#allocation1], 33
      %1219 = vst [vmem:[%s1218] ss:$4 sm:$0xff] %v958
      %s1220 = scalar_lea.vmem [#allocation1], 34
      %1221 = vst [vmem:[%s1220] ss:$4 sm:$0xff] %v959
      %s1222 = scalar_lea.vmem [#allocation1], 35
      %1223 = vst [vmem:[%s1222] ss:$4 sm:$0xff] %v960
      %v1224 = vld.sshfl [vmem:[#allocation1] sm:$0xff pattern:$0x73625140]
      %v1225 = vld.sshfl [vmem:[#allocation1 + $0x20] sm:$0xff pattern:$0x73625140]
      %1226 = vst [vmem:[#allocation1] ss:$4 sm:$0xff] %v961
      %1227 = vst [vmem:[%s1210] ss:$4 sm:$0xff] %v962
      %1228 = vst [vmem:[%s1212] ss:$4 sm:$0xff] %v963
      %1229 = vst [vmem:[%s1214] ss:$4 sm:$0xff] %v964
      %1230 = vst [vmem:[%s1216] ss:$4 sm:$0xff] %v965
      %1231 = vst [vmem:[%s1218] ss:$4 sm:$0xff] %v966
      %1232 = vst [vmem:[%s1220] ss:$4 sm:$0xff] %v967
      %1233 = vst [vmem:[%s1222] ss:$4 sm:$0xff] %v968
      %v1234 = vld.sshfl [vmem:[#allocation1] sm:$0xff pattern:$0x73625140]
      %v1235 = vld.sshfl [vmem:[#allocation1 + $0x20] sm:$0xff pattern:$0x73625140]
      %1236 = vst [vmem:[#allocation1] ss:$4 sm:$0xff] %v969
      %1237 = vst [vmem:[%s1210] ss:$4 sm:$0xff] %v970
      %1238 = vst [vmem:[%s1212] ss:$4 sm:$0xff] %v971
      %1239 = vst [vmem:[%s1214] ss:$4 sm:$0xff] %v972
      %1240 = vst [vmem:[%s1216] ss:$4 sm:$0xff] %v973
      %1241 = vst [vmem:[%s1218] ss:$4 sm:$0xff] %v974
      %1242 = vst [vmem:[%s1220] ss:$4 sm:$0xff] %v975
      %1243 = vst [vmem:[%s1222] ss:$4 sm:$0xff] %v976
      %v1244 = vld.sshfl [vmem:[#allocation1] sm:$0xff pattern:$0x73625140]
      %v1245 = vld.sshfl [vmem:[#allocation1 + $0x20] sm:$0xff pattern:$0x73625140]
      %1246 = vst [vmem:[#allocation1] ss:$4 sm:$0xff] %v977
      %1247 = vst [vmem:[%s1210] ss:$4 sm:$0xff] %v978
      %1248 = vst [vmem:[%s1212] ss:$4 sm:$0xff] %v979
      %1249 = vst [vmem:[%s1214] ss:$4 sm:$0xff] %v980
      %1250 = vst [vmem:[%s1216] ss:$4 sm:$0xff] %v981
      %1251 = vst [vmem:[%s1218] ss:$4 sm:$0xff] %v982
      %1252 = vst [vmem:[%s1220] ss:$4 sm:$0xff] %v983
      %1253 = vst [vmem:[%s1222] ss:$4 sm:$0xff] %v984
      %v1254 = vld.sshfl [vmem:[#allocation1] sm:$0xff pattern:$0x73625140]
      %v1255 = vld.sshfl [vmem:[#allocation1 + $0x20] sm:$0xff pattern:$0x73625140]
      %1256 = vst [vmem:[#allocation1] ss:$4 sm:$0xff] %v985
      %1257 = vst [vmem:[%s1210] ss:$4 sm:$0xff] %v986
      %1258 = vst [vmem:[%s1212] ss:$4 sm:$0xff] %v987
      %1259 = vst [vmem:[%s1214] ss:$4 sm:$0xff] %v988
      %1260 = vst [vmem:[%s1216] ss:$4 sm:$0xff] %v989
      %1261 = vst [vmem:[%s1218] ss:$4 sm:$0xff] %v990
      %1262 = vst [vmem:[%s1220] ss:$4 sm:$0xff] %v991
      %1263 = vst [vmem:[%s1222] ss:$4 sm:$0xff] %v992
      %v1264 = vld.sshfl [vmem:[#allocation1] sm:$0xff pattern:$0x73625140]
      %v1265 = vld.sshfl [vmem:[#allocation1 + $0x20] sm:$0xff pattern:$0x73625140]
      %1266 = vst [vmem:[#allocation1] ss:$4 sm:$0xff] %v993
      %1267 = vst [vmem:[%s1210] ss:$4 sm:$0xff] %v994
      %1268 = vst [vmem:[%s1212] ss:$4 sm:$0xff] %v995
      %1269 = vst [vmem:[%s1214] ss:$4 sm:$0xff] %v996
      %1270 = vst [vmem:[%s1216] ss:$4 sm:$0xff] %v997
      %1271 = vst [vmem:[%s1218] ss:$4 sm:$0xff] %v998
      %1272 = vst [vmem:[%s1220] ss:$4 sm:$0xff] %v999
      %1273 = vst [vmem:[%s1222] ss:$4 sm:$0xff] %v1000
      %v1274 = vld.sshfl [vmem:[#allocation1] sm:$0xff pattern:$0x73625140]
      %v1275 = vld.sshfl [vmem:[#allocation1 + $0x20] sm:$0xff pattern:$0x73625140]
      %1276 = vst [vmem:[#allocation1] ss:$4 sm:$0xff] %v1001
      %1277 = vst [vmem:[%s1210] ss:$4 sm:$0xff] %v1002
      %1278 = vst [vmem:[%s1212] ss:$4 sm:$0xff] %v1003
      %1279 = vst [vmem:[%s1214] ss:$4 sm:$0xff] %v1004
      %1280 = vst [vmem:[%s1216] ss:$4 sm:$0xff] %v1005
      %1281 = vst [vmem:[%s1218] ss:$4 sm:$0xff] %v1006
      %1282 = vst [vmem:[%s1220] ss:$4 sm:$0xff] %v1007
      %1283 = vst [vmem:[%s1222] ss:$4 sm:$0xff] %v1008
      %v1284 = vld.sshfl [vmem:[#allocation1] sm:$0xff pattern:$0x73625140]
      %v1285 = vld.sshfl [vmem:[#allocation1 + $0x20] sm:$0xff pattern:$0x73625140]
      %1286 = vst [vmem:[#allocation1] ss:$4 sm:$0xff] %v1009
      %1287 = vst [vmem:[%s1210] ss:$4 sm:$0xff] %v1010
      %1288 = vst [vmem:[%s1212] ss:$4 sm:$0xff] %v1011
      %1289 = vst [vmem:[%s1214] ss:$4 sm:$0xff] %v1012
      %1290 = vst [vmem:[%s1216] ss:$4 sm:$0xff] %v1013
      %1291 = vst [vmem:[%s1218] ss:$4 sm:$0xff] %v1014
      %1292 = vst [vmem:[%s1220] ss:$4 sm:$0xff] %v1015
      %1293 = vst [vmem:[%s1222] ss:$4 sm:$0xff] %v1016
      %v1294 = vld.sshfl [vmem:[#allocation1] sm:$0xff pattern:$0x73625140]
      %v1295 = vld.sshfl [vmem:[#allocation1 + $0x20] sm:$0xff pattern:$0x73625140]
      %1296 = vst [vmem:[#allocation1] ss:$4 sm:$0xff] %v1017
      %1297 = vst [vmem:[%s1210] ss:$4 sm:$0xff] %v1018
      %1298 = vst [vmem:[%s1212] ss:$4 sm:$0xff] %v1019
      %1299 = vst [vmem:[%s1214] ss:$4 sm:$0xff] %v1020
      %1300 = vst [vmem:[%s1216] ss:$4 sm:$0xff] %v1021
      %1301 = vst [vmem:[%s1218] ss:$4 sm:$0xff] %v1022
      %1302 = vst [vmem:[%s1220] ss:$4 sm:$0xff] %v1023
      %1303 = vst [vmem:[%s1222] ss:$4 sm:$0xff] %v1024
      %v1304 = vld.sshfl [vmem:[#allocation1] sm:$0xff pattern:$0x73625140]
      %v1305 = vld.sshfl [vmem:[#allocation1 + $0x20] sm:$0xff pattern:$0x73625140]
      %1306 = vst [vmem:[#allocation1] ss:$4 sm:$0xff] %v1025
      %1307 = vst [vmem:[%s1210] ss:$4 sm:$0xff] %v1026
      %1308 = vst [vmem:[%s1212] ss:$4 sm:$0xff] %v1027
      %1309 = vst [vmem:[%s1214] ss:$4 sm:$0xff] %v1028
      %1310 = vst [vmem:[%s1216] ss:$4 sm:$0xff] %v1029
      %1311 = vst [vmem:[%s1218] ss:$4 sm:$0xff] %v1030
      %1312 = vst [vmem:[%s1220] ss:$4 sm:$0xff] %v1031
      %1313 = vst [vmem:[%s1222] ss:$4 sm:$0xff] %v1032
      %v1314 = vld.sshfl [vmem:[#allocation1] sm:$0xff pattern:$0x73625140]
      %v1315 = vld.sshfl [vmem:[#allocation1 + $0x20] sm:$0xff pattern:$0x73625140]
      %1316 = vst [vmem:[#allocation1] ss:$4 sm:$0xff] %v1033
      %1317 = vst [vmem:[%s1210] ss:$4 sm:$0xff] %v1034
      %1318 = vst [vmem:[%s1212] ss:$4 sm:$0xff] %v1035
      %1319 = vst [vmem:[%s1214] ss:$4 sm:$0xff] %v1036
      %1320 = vst [vmem:[%s1216] ss:$4 sm:$0xff] %v1037
      %1321 = vst [vmem:[%s1218] ss:$4 sm:$0xff] %v1038
      %1322 = vst [vmem:[%s1220] ss:$4 sm:$0xff] %v1039
      %1323 = vst [vmem:[%s1222] ss:$4 sm:$0xff] %v1040
      %v1324 = vld.sshfl [vmem:[#allocation1] sm:$0xff pattern:$0x73625140]
      %v1325 = vld.sshfl [vmem:[#allocation1 + $0x20] sm:$0xff pattern:$0x73625140]
      %1326 = vst [vmem:[#allocation1] ss:$4 sm:$0xff] %v1041
      %1327 = vst [vmem:[%s1210] ss:$4 sm:$0xff] %v1042
      %1328 = vst [vmem:[%s1212] ss:$4 sm:$0xff] %v1043
      %1329 = vst [vmem:[%s1214] ss:$4 sm:$0xff] %v1044
      %1330 = vst [vmem:[%s1216] ss:$4 sm:$0xff] %v1045
      %1331 = vst [vmem:[%s1218] ss:$4 sm:$0xff] %v1046
      %1332 = vst [vmem:[%s1220] ss:$4 sm:$0xff] %v1047
      %1333 = vst [vmem:[%s1222] ss:$4 sm:$0xff] %v1048
      %v1334 = vld.sshfl [vmem:[#allocation1] sm:$0xff pattern:$0x73625140]
      %v1335 = vld.sshfl [vmem:[#allocation1 + $0x20] sm:$0xff pattern:$0x73625140]
      %1336 = vst [vmem:[#allocation1] ss:$4 sm:$0xff] %v1049
      %1337 = vst [vmem:[%s1210] ss:$4 sm:$0xff] %v1050
      %1338 = vst [vmem:[%s1212] ss:$4 sm:$0xff] %v1051
      %1339 = vst [vmem:[%s1214] ss:$4 sm:$0xff] %v1052
      %1340 = vst [vmem:[%s1216] ss:$4 sm:$0xff] %v1053
      %1341 = vst [vmem:[%s1218] ss:$4 sm:$0xff] %v1054
      %1342 = vst [vmem:[%s1220] ss:$4 sm:$0xff] %v1055
      %1343 = vst [vmem:[%s1222] ss:$4 sm:$0xff] %v1056
      %v1344 = vld.sshfl [vmem:[#allocation1] sm:$0xff pattern:$0x73625140]
      %v1345 = vld.sshfl [vmem:[#allocation1 + $0x20] sm:$0xff pattern:$0x73625140]
      %1346 = vst [vmem:[#allocation1] ss:$4 sm:$0xff] %v1057
      %1347 = vst [vmem:[%s1210] ss:$4 sm:$0xff] %v1058
      %1348 = vst [vmem:[%s1212] ss:$4 sm:$0xff] %v1059
      %1349 = vst [vmem:[%s1214] ss:$4 sm:$0xff] %v1060
      %1350 = vst [vmem:[%s1216] ss:$4 sm:$0xff] %v1061
      %1351 = vst [vmem:[%s1218] ss:$4 sm:$0xff] %v1062
      %1352 = vst [vmem:[%s1220] ss:$4 sm:$0xff] %v1063
      %1353 = vst [vmem:[%s1222] ss:$4 sm:$0xff] %v1064
      %v1354 = vld.sshfl [vmem:[#allocation1] sm:$0xff pattern:$0x73625140]
      %v1355 = vld.sshfl [vmem:[#allocation1 + $0x20] sm:$0xff pattern:$0x73625140]
      %1356 = vst [vmem:[#allocation1] ss:$4 sm:$0xff] %v1065
      %1357 = vst [vmem:[%s1210] ss:$4 sm:$0xff] %v1066
      %1358 = vst [vmem:[%s1212] ss:$4 sm:$0xff] %v1067
      %1359 = vst [vmem:[%s1214] ss:$4 sm:$0xff] %v1068
      %1360 = vst [vmem:[%s1216] ss:$4 sm:$0xff] %v1069
      %1361 = vst [vmem:[%s1218] ss:$4 sm:$0xff] %v1070
      %1362 = vst [vmem:[%s1220] ss:$4 sm:$0xff] %v1071
      %1363 = vst [vmem:[%s1222] ss:$4 sm:$0xff] %v1072
      %v1364 = vld.sshfl [vmem:[#allocation1] sm:$0xff pattern:$0x73625140]
      %v1365 = vld.sshfl [vmem:[#allocation1 + $0x20] sm:$0xff pattern:$0x73625140]
      %1366 = vst [vmem:[#allocation1] ss:$4 sm:$0xff] %v1073
      %1367 = vst [vmem:[%s1210] ss:$4 sm:$0xff] %v1074
      %1368 = vst [vmem:[%s1212] ss:$4 sm:$0xff] %v1075
      %1369 = vst [vmem:[%s1214] ss:$4 sm:$0xff] %v1076
      %1370 = vst [vmem:[%s1216] ss:$4 sm:$0xff] %v1077
      %1371 = vst [vmem:[%s1218] ss:$4 sm:$0xff] %v1078
      %1372 = vst [vmem:[%s1220] ss:$4 sm:$0xff] %v1079
      %1373 = vst [vmem:[%s1222] ss:$4 sm:$0xff] %v1080
      %v1374 = vld.sshfl [vmem:[#allocation1] sm:$0xff pattern:$0x73625140]
      %v1375 = vld.sshfl [vmem:[#allocation1 + $0x20] sm:$0xff pattern:$0x73625140]
      %vm1408 = vcmask 64512
      %1409 = vst.msk [vmem:[%s276] sm:$0xff] %vm1408, %v1224
      %1410 = vst.msk [vmem:[%s276 + $0x8] sm:$0xff] %vm1408, %v1225
      %1411 = vst.msk [vmem:[%s276 + $0x10] sm:$0xff] %vm1408, %v1234
      %1412 = vst.msk [vmem:[%s276 + $0x18] sm:$0xff] %vm1408, %v1235
      %1413 = vst.msk [vmem:[%s276 + $0x20] sm:$0xff] %vm1408, %v1244
      %1414 = vst.msk [vmem:[%s276 + $0x28] sm:$0xff] %vm1408, %v1245
      %1415 = vst.msk [vmem:[%s276 + $0x30] sm:$0xff] %vm1408, %v1254
      %1416 = vst.msk [vmem:[%s276 + $0x38] sm:$0xff] %vm1408, %v1255
      %1417 = vst.msk [vmem:[%s276 + $0x40] sm:$0xff] %vm1408, %v1264
      %1418 = vst.msk [vmem:[%s276 + $0x48] sm:$0xff] %vm1408, %v1265
      %1419 = vst.msk [vmem:[%s276 + $0x50] sm:$0xff] %vm1408, %v1274
      %1420 = vst.msk [vmem:[%s276 + $0x58] sm:$0xff] %vm1408, %v1275
      %1421 = vst.msk [vmem:[%s276 + $0x60] sm:$0xff] %vm1408, %v1284
      %1422 = vst.msk [vmem:[%s276 + $0x68] sm:$0xff] %vm1408, %v1285
      %1423 = vst.msk [vmem:[%s276 + $0x70] sm:$0xff] %vm1408, %v1294
      %1424 = vst.msk [vmem:[%s276 + $0x78] sm:$0xff] %vm1408, %v1295
      %1425 = vst.msk [vmem:[%s276 + $0x80] sm:$0xff] %vm1408, %v1304
      %1426 = vst.msk [vmem:[%s276 + $0x88] sm:$0xff] %vm1408, %v1305
      %1427 = vst.msk [vmem:[%s276 + $0x90] sm:$0xff] %vm1408, %v1314
      %1428 = vst.msk [vmem:[%s276 + $0x98] sm:$0xff] %vm1408, %v1315
      %1429 = vst.msk [vmem:[%s276 + $0xa0] sm:$0xff] %vm1408, %v1324
      %1430 = vst.msk [vmem:[%s276 + $0xa8] sm:$0xff] %vm1408, %v1325
      %1431 = vst.msk [vmem:[%s276 + $0xb0] sm:$0xff] %vm1408, %v1334
      %1432 = vst.msk [vmem:[%s276 + $0xb8] sm:$0xff] %vm1408, %v1335
      %1433 = vst.msk [vmem:[%s276 + $0xc0] sm:$0xff] %vm1408, %v1344
      %1434 = vst.msk [vmem:[%s276 + $0xc8] sm:$0xff] %vm1408, %v1345
      %1435 = vst.msk [vmem:[%s276 + $0xd0] sm:$0xff] %vm1408, %v1354
      %1436 = vst.msk [vmem:[%s276 + $0xd8] sm:$0xff] %vm1408, %v1355
      %1437 = vst.msk [vmem:[%s276 + $0xe0] sm:$0xff] %vm1408, %v1364
      %1438 = vst.msk [vmem:[%s276 + $0xe8] sm:$0xff] %vm1408, %v1365
      %1439 = vst.msk [vmem:[%s276 + $0xf0] sm:$0xff] %vm1408, %v1374
      %1440 = vst.msk [vmem:[%s276 + $0xf8] sm:$0xff] %vm1408, %v1375
      %s1441 = smul.u32 16, %s20
      %p1442 = scmp.lt.s32.totalorder %s19, 1
      %s1443 = scalar_select %p1442, %s19, 1
      %p1444 = scmp.lt.s32.totalorder %s1441, 15
      %s1445 = scalar_select %p1444, %s1441, 15
      %s1446 = smul.addr %s1445, 2
      %s1447 = smul.addr %s1443, 32
      %s1448 = sadd.s32 %s1446, %s1447
      %s1449 = smul.addr %s1448, 8
      %s1450 = scalar_lea.vmem %s4, %s1449
      // Predicated region
      $region37: #{tpu_custom_call.1} parent=35 // pred_check
        %p1451 = pneg %p145
      $region38: #{tpu_custom_call.1} parent=35 // pred_check_branch
        %1453 = sbr.rel (%p1451) target = $region40
      $region39: #{tpu_custom_call.1} parent=35 // pred_region
        %s1454 = smul.u32 16, %s20
      $region40: #{tpu_custom_call.1} parent=35 // pred_fallthru
        _
    $region36: #{tpu_custom_call.1} parent=5 // pred_fallthru
      _
    %p1455 = scmp.le.s32.totalorder 2, %s10
    // Predicated region
    $region41: #{tpu_custom_call.1} parent=5 // pred_check
      %p1456 = pneg %p1455
    $region42: #{tpu_custom_call.1} parent=5 // pred_check_branch
      %1458 = sbr.rel (%p1456) target = $region44
    $region43: #{tpu_custom_call.1} parent=5 // pred_region
      %s1459 = ssub.s32 %s10, 2
      // Predicated region
      $region45: #{tpu_custom_call.1} parent=43 // pred_check
        %p1460 = pneg %p151
      $region46: #{tpu_custom_call.1} parent=43 // pred_check_branch
        %1462 = sbr.rel (%p1460) target = $region48
      $region47: #{tpu_custom_call.1} parent=43 // pred_region
        %s1463 = smul.u32 16, %s22
        %p1464 = scmp.lt.s32.totalorder %s21, 1
        %s1465 = scalar_select %p1464, %s21, 1
        %p1466 = scmp.lt.s32.totalorder %s1463, 15
        %s1467 = scalar_select %p1466, %s1463, 15
        %s1468 = smul.addr %s1467, 2
        %s1469 = smul.addr %s1465, 32
        %s1470 = sadd.s32 %s1468, %s1469
        %s1471 = smul.addr %s1470, 8
        %s1472 = scalar_lea.vmem %s4, %s1471
      $region48: #{tpu_custom_call.1} parent=43 // pred_fallthru
        _
    $region44: #{tpu_custom_call.1} parent=5 // pred_fallthru
      _
  $region6: #{tpu_custom_call.1} parent=0 // loop_footer
    %s14 = sadd.s32 1, %s10
  $region7: #{tpu_custom_call.1} parent=0 // loop_footer_branch
    %9 = sbr.rel target = $region3
  $region8: #{tpu_custom_call.1} parent=0 // loop_exit
    _

</llo_original>
